<compile_context>
chip_gen: v5e
topology: v5e:2x2
jax: 0.10.0
libtpu: 0.0.40
codegen_flags: <defaults>
</compile_context>

<pallas_src>
import math
import functools

import jax
import jax.numpy as jnp
from jax.experimental import pallas as pl
from jax.experimental.pallas import tpu as pltpu


# ---------------------------------------------------------------------------
# Buffer setup (plain JAX glue, mirrors PositionalEncoding.__init__)
# ---------------------------------------------------------------------------
def make_positional_encoding(d_model: int, max_len: int = 1000,
                             dtype=jnp.float32) -> jnp.ndarray:
    position = jnp.arange(max_len, dtype=jnp.float32)[:, None]          # (max_len, 1)
    div_term = jnp.exp(
        jnp.arange(0, d_model, 2, dtype=jnp.float32)
        * (-math.log(10000.0) / d_model)
    )                                                                    # (d_model/2,)
    pe = jnp.zeros((max_len, 1, d_model), dtype=dtype)
    pe = pe.at[:, 0, 0::2].set(jnp.sin(position * div_term))
    pe = pe.at[:, 0, 1::2].set(jnp.cos(position * div_term))
    return pe


# ---------------------------------------------------------------------------
# Pallas kernels
# ---------------------------------------------------------------------------
def _pe_add_kernel(x_ref, pe_ref, o_ref):
    # x_ref: (TS, B, D), pe_ref: (TS, 1, D) -> broadcast over the batch axis.
    o_ref[...] = (x_ref[...] + pe_ref[...]).astype(o_ref.dtype)


def _pe_add_dropout_kernel(x_ref, pe_ref, mask_ref, o_ref, *, scale: float):
    # Compute in f32 so the 1/(1-p) scale is not rounded in bf16.
    y = x_ref[...].astype(jnp.float32) + pe_ref[...].astype(jnp.float32)
    kept = y * mask_ref[...].astype(jnp.float32)
    o_ref[...] = (kept * jnp.float32(scale)).astype(o_ref.dtype)


# ---------------------------------------------------------------------------
# Tile-size selection: keep all double-buffered streams under a VMEM budget.
# ---------------------------------------------------------------------------
_VMEM_LIMIT_BYTES = 32 * 1024 * 1024        # safe on v5e/v6e/v7x
_VMEM_BUDGET_BYTES = 24 * 1024 * 1024       # leave headroom for compiler scratch


def _choose_seq_tile(S: int, B: int, D: int, itemsize: int,
                     n_streams: int) -> int:
    # n_streams = number of (TS, B, D)-shaped arrays streamed through VMEM
    # (each double-buffered); pe adds a small (TS, 1, D) block per buffer.
    per_row = (2 * n_streams) * B * D * itemsize + 2 * D * itemsize
    ts = max(1, _VMEM_BUDGET_BYTES // per_row)
    ts = int(min(S, ts))
    if ts >= 8:
        ts = (ts // 8) * 8          # keep tile boundaries nicely aligned
    return max(1, ts)


# ---------------------------------------------------------------------------
# Wrapper (forward pass)
# ---------------------------------------------------------------------------
def positional_encoding_forward(x, pe, *, dropout_p: float = 0.1,
                                training: bool = False, rng_key=None):
    """x: [S, B, D]; pe: [max_len, 1, D]. Returns dropout(x + pe[:S])."""
    S, B, D = x.shape
    pe_s = pe[:S].astype(x.dtype)            # (S, 1, D), match x dtype
    itemsize = jnp.dtype(x.dtype).itemsize

    use_dropout = training and dropout_p > 0.0
    n_streams = 3 if use_dropout else 2      # (x, [mask], out) tiles in flight
    TS = _choose_seq_tile(S, B, D, itemsize, n_streams)
    grid = (pl.cdiv(S, TS),)

    x_spec = pl.BlockSpec((TS, B, D), lambda i: (i, 0, 0))
    pe_spec = pl.BlockSpec((TS, 1, D), lambda i: (i, 0, 0))
    o_spec = pl.BlockSpec((TS, B, D), lambda i: (i, 0, 0))

    out_shape = jax.ShapeDtypeStruct((S, B, D), x.dtype)
    compiler_params = pltpu.CompilerParams(
        dimension_semantics=("parallel",),
        vmem_limit_bytes=_VMEM_LIMIT_BYTES,
    )

    if not use_dropout:
        # nn.Dropout is identity in eval mode (or when p == 0).
        return pl.pallas_call(
            _pe_add_kernel,
            out_shape=out_shape,
            grid=grid,
            in_specs=[x_spec, pe_spec],
            out_specs=o_spec,
            compiler_params=compiler_params,
        )(x, pe_s)

    if rng_key is None:
        rng_key = jax.random.PRNGKey(0)
    # Keep-mask generated outside the kernel (the TPU hardware PRNG has no
    # interpret/CPU lowering); multiply + rescale is fused inside the kernel.
    keep = jax.random.bernoulli(rng_key, p=1.0 - float(dropout_p),
                                shape=(S, B, D))
    mask = keep.astype(x.dtype)

    kernel = functools.partial(
        _pe_add_dropout_kernel, scale=1.0 / (1.0 - float(dropout_p)))
    return pl.pallas_call(
        kernel,
        out_shape=out_shape,
        grid=grid,
        in_specs=[x_spec, pe_spec, x_spec],   # mask tiled exactly like x
        out_specs=o_spec,
        compiler_params=compiler_params,
    )(x, pe_s, mask)


# ---------------------------------------------------------------------------
# Demo / self-check
# ---------------------------------------------------------------------------
if __name__ == "__main__":
    d_model = 32
    max_len = 64           # small, deterministic; module default is 1000
    seq_len = 8
    batch = 2
    p = 0.1

    key = jax.random.PRNGKey(0)
    x = jax.random.normal(key, (seq_len, batch, d_model), dtype=jnp.float32)

    pe = make_positional_encoding(d_model, max_len=max_len)

    # Eval-mode forward (dropout = identity): must match reference exactly.
    y_eval = positional_encoding_forward(x, pe, dropout_p=p, training=False)
    y_eval = jax.block_until_ready(y_eval)
    y_ref = x + pe[:seq_len]
    assert y_eval.shape == (seq_len, batch, d_model)
    assert jnp.allclose(y_eval, y_ref, atol=1e-6, rtol=1e-6), "eval-mode mismatch"

    # Training-mode forward (fused dropout): check shape / scaling invariants.
    drop_key = jax.random.PRNGKey(1234)
    y_train = positional_encoding_forward(x, pe, dropout_p=p, training=True,
                                          rng_key=drop_key)
    y_train = jax.block_until_ready(y_train)
    assert y_train.shape == (seq_len, batch, d_model)
    # Every surviving element equals (x + pe) / (1 - p); dropped elements are 0.
    scaled_ref = y_ref / (1.0 - p)
    ok = jnp.all((jnp.abs(y_train) < 1e-12) |
                 (jnp.abs(y_train - scaled_ref) < 1e-5))
    assert bool(ok), "training-mode dropout values inconsistent"

    print("KERNEL_OK")
</pallas_src>

<mosaic_0001>
module attributes {stable_mosaic.version = 11 : i64} {
  func.func @_pe_add_kernel(%arg0: i32, %arg1: memref<8x2x32xf32, #tpu.memory_space<vmem>>, %arg2: memref<8x1x32xf32, #tpu.memory_space<vmem>>, %arg3: memref<8x2x32xf32, #tpu.memory_space<vmem>>) attributes {dimension_semantics = [#tpu.dimension_semantics<parallel>], iteration_bounds = array<i64: 1>, scalar_prefetch = 0 : i64, scratch_operands = 0 : i64, tpu.core_type = #tpu.core_type<tc>, window_params = [{transform_indices = @transform_0, window_bounds = array<i64: 8, 2, 32>}, {transform_indices = @transform_1, window_bounds = array<i64: 8, 1, 32>}, {transform_indices = @transform_2, window_bounds = array<i64: 8, 2, 32>}]} {
    %c0 = arith.constant 0 : index
    %c0_0 = arith.constant 0 : index
    %c0_1 = arith.constant 0 : index
    %0 = vector.load %arg1[%c0, %c0_0, %c0_1] : memref<8x2x32xf32, #tpu.memory_space<vmem>>, vector<8x2x32xf32>
    %c0_2 = arith.constant 0 : index
    %c0_3 = arith.constant 0 : index
    %c0_4 = arith.constant 0 : index
    %1 = vector.load %arg2[%c0_2, %c0_3, %c0_4] : memref<8x1x32xf32, #tpu.memory_space<vmem>>, vector<8x1x32xf32>
    %2 = vector.broadcast %1 : vector<8x1x32xf32> to vector<8x2x32xf32>
    %3 = arith.addf %0, %2 : vector<8x2x32xf32>
    %c0_5 = arith.constant 0 : index
    %c0_6 = arith.constant 0 : index
    %c0_7 = arith.constant 0 : index
    %4 = vector.load %arg3[%c0_5, %c0_6, %c0_7] : memref<8x2x32xf32, #tpu.memory_space<vmem>>, vector<8x2x32xf32>
    tpu.vector_store %arg3[%c0_5, %c0_6, %c0_7], %3 {strides = array<i32>} : memref<8x2x32xf32, #tpu.memory_space<vmem>>, vector<8x2x32xf32>,
    return
  }
  func.func @transform_0(%arg0: i32) -> (i32, i32, i32) {
    %c0_i32 = arith.constant 0 : i32
    %c0_i32_0 = arith.constant 0 : i32
    %c0_i32_1 = arith.constant 0 : i32
    return %arg0, %c0_i32, %c0_i32_0 : i32, i32, i32
  }
  func.func @transform_1(%arg0: i32) -> (i32, i32, i32) {
    %c0_i32 = arith.constant 0 : i32
    %c0_i32_0 = arith.constant 0 : i32
    %c0_i32_1 = arith.constant 0 : i32
    return %arg0, %c0_i32, %c0_i32_0 : i32, i32, i32
  }
  func.func @transform_2(%arg0: i32) -> (i32, i32, i32) {
    %c0_i32 = arith.constant 0 : i32
    %c0_i32_0 = arith.constant 0 : i32
    %c0_i32_1 = arith.constant 0 : i32
    return %arg0, %c0_i32, %c0_i32_0 : i32, i32, i32
  }
}

</mosaic_0001>

<llo_original>
// kernel: tpu_custom_call.1
$region0: #{tpu_custom_call.1}
  #allocation0 [shape = 'u32[]', space=smem, size = 0x4, offset = 0x4, fixed_abs, tag = 'smem constant byte address 0x4 - core index']
  #allocation1 [shape = 'u32[72,128]{1,0:T(1,128)}', space=vmem, size = 0x9000, scoped, tag = 'internal scratch']
  %s0 = inlined_call_operand.hbm [shape: f32[8,2,32], index: 0, kind: input, shape index: {}]
  %s1 = inlined_call_operand.hbm [shape: f32[8,1,32], index: 1, kind: input, shape index: {}]
  %s2 = inlined_call_operand.hbm [shape: f32[8,2,32], index: 2, kind: output, shape index: {}]
  %s3 = sld [smem:[#allocation0]]
  $region26: #{tpu_custom_call.1} parent=0
    _
  %s5 = ssub.s32 1, %s3
  %s6 = scalar_select 0, %s5, %s3
  $region1: #{tpu_custom_call.1} parent=0
    #allocation2 [shape = 'u8[8192]{0}', space=vmem, size = 0x2000, scoped, tag = 'input window, operand 0, single buffered']
    #allocation3 [shape = 's32[1]{0}', space=sflag, size = 0x4, scoped, tag = 'scoped memory for tpu_custom_call.1']
    #allocation4 [shape = 's32[1]{0}', space=sflag, size = 0x4, scoped, tag = 'scoped memory for tpu_custom_call.1']
    #allocation5 [shape = 'u8[4096]{0}', space=vmem, size = 0x1000, scoped, tag = 'input window, operand 1, single buffered']
    #allocation6 [shape = 's32[1]{0}', space=sflag, size = 0x4, scoped, tag = 'scoped memory for tpu_custom_call.1']
    #allocation7 [shape = 'u8[8192]{0}', space=vmem, size = 0x2000, scoped, tag = 'output window, operand 0, single buffered']
    %7 = vsyncpa [#allocation3], 0
    %8 = vsyncpa [#allocation6], 0
    %9 = vsyncpa [#allocation4], 0
    // Predicated region
    $region2: #{tpu_custom_call.1} parent=1 // pred_check
      _
    $region3: #{tpu_custom_call.1} parent=1 // pred_check_branch
      %11 = sbr.rel (0) target = $region5
    $region4: #{tpu_custom_call.1} parent=1 // pred_region
      %13 = vsyncadd [#allocation3], 0
      %s14 = sshll.u32 %s0, 4
      %s15 = int_to_ptr.hbm [resolvable:$true] %s14
      %s16 = sshll.u32 [#allocation2], 4
      %s17 = int_to_ptr.vmem [resolvable:$true] %s16
      %22 = dma.hbm_to_vmem [thread:$0]  %s15, 256, %s17, [#allocation3], 32, 32, 2
    $region5: #{tpu_custom_call.1} parent=1 // pred_fallthru
      _
    // Predicated region
    $region6: #{tpu_custom_call.1} parent=1 // pred_check
      _
    $region7: #{tpu_custom_call.1} parent=1 // pred_check_branch
      %24 = sbr.rel (0) target = $region9
    $region8: #{tpu_custom_call.1} parent=1 // pred_region
      %26 = vsyncadd [#allocation6], 0
      %s27 = sshll.u32 %s1, 4
      %s28 = int_to_ptr.hbm [resolvable:$true] %s27
      %s29 = sshll.u32 [#allocation5], 4
      %s30 = int_to_ptr.vmem [resolvable:$true] %s29
      %35 = dma.hbm_to_vmem [thread:$0]  %s28, 128, %s30, [#allocation6], 16, 16, 1
    $region9: #{tpu_custom_call.1} parent=1 // pred_fallthru
      _
    // Predicated region
    $region10: #{tpu_custom_call.1} parent=1 // pred_check
      _
    $region11: #{tpu_custom_call.1} parent=1 // pred_check_branch
      %37 = sbr.rel (0) target = $region13
    $region12: #{tpu_custom_call.1} parent=1 // pred_region
      %39 = dma.done [#allocation3], 256
    $region13: #{tpu_custom_call.1} parent=1 // pred_fallthru
      _
    // Predicated region
    $region14: #{tpu_custom_call.1} parent=1 // pred_check
      _
    $region15: #{tpu_custom_call.1} parent=1 // pred_check_branch
      %41 = sbr.rel (0) target = $region17
    $region16: #{tpu_custom_call.1} parent=1 // pred_region
      %43 = dma.done [#allocation6], 128
    $region17: #{tpu_custom_call.1} parent=1 // pred_fallthru
      _
    %v44 = vld [vmem:[#allocation2] sm:$0x3]
    %v45 = vld [vmem:[#allocation2 + $0x2] sm:$0x3]
    %v46 = vld [vmem:[#allocation2 + $0x4] sm:$0x3]
    %v47 = vld [vmem:[#allocation2 + $0x6] sm:$0x3]
    %v48 = vld [vmem:[#allocation2 + $0x8] sm:$0x3]
    %v49 = vld [vmem:[#allocation2 + $0xa] sm:$0x3]
    %v50 = vld [vmem:[#allocation2 + $0xc] sm:$0x3]
    %v51 = vld [vmem:[#allocation2 + $0xe] sm:$0x3]
    %v52 = vld [vmem:[#allocation5] sm:$0x1]
    %v53 = vld [vmem:[#allocation5 + $0x1] sm:$0x1]
    %v54 = vld [vmem:[#allocation5 + $0x2] sm:$0x1]
    %v55 = vld [vmem:[#allocation5 + $0x3] sm:$0x1]
    %v56 = vld [vmem:[#allocation5 + $0x4] sm:$0x1]
    %v57 = vld [vmem:[#allocation5 + $0x5] sm:$0x1]
    %v58 = vld [vmem:[#allocation5 + $0x6] sm:$0x1]
    %v59 = vld [vmem:[#allocation5 + $0x7] sm:$0x1]
    %v68 = vperm.slane %v52, 0
    %v69 = vperm.slane %v53, 0
    %v70 = vperm.slane %v54, 0
    %v71 = vperm.slane %v55, 0
    %v72 = vperm.slane %v56, 0
    %v73 = vperm.slane %v57, 0
    %v74 = vperm.slane %v58, 0
    %v75 = vperm.slane %v59, 0
    %v84 = vadd.f32 %v44, %v68
    %v85 = vadd.f32 %v45, %v69
    %v86 = vadd.f32 %v46, %v70
    %v87 = vadd.f32 %v47, %v71
    %v88 = vadd.f32 %v48, %v72
    %v89 = vadd.f32 %v49, %v73
    %v90 = vadd.f32 %v50, %v74
    %v91 = vadd.f32 %v51, %v75
    %vm92 = vcmask 254976
    %93 = vst.msk [vmem:[#allocation7] sm:$0x3] %vm92, %v84
    %94 = vst.msk [vmem:[#allocation7 + $0x2] sm:$0x3] %vm92, %v85
    %95 = vst.msk [vmem:[#allocation7 + $0x4] sm:$0x3] %vm92, %v86
    %96 = vst.msk [vmem:[#allocation7 + $0x6] sm:$0x3] %vm92, %v87
    %97 = vst.msk [vmem:[#allocation7 + $0x8] sm:$0x3] %vm92, %v88
    %98 = vst.msk [vmem:[#allocation7 + $0xa] sm:$0x3] %vm92, %v89
    %99 = vst.msk [vmem:[#allocation7 + $0xc] sm:$0x3] %vm92, %v90
    %100 = vst.msk [vmem:[#allocation7 + $0xe] sm:$0x3] %vm92, %v91
    // Predicated region
    $region18: #{tpu_custom_call.1} parent=1 // pred_check
      _
    $region19: #{tpu_custom_call.1} parent=1 // pred_check_branch
      %102 = sbr.rel (0) target = $region21
    $region20: #{tpu_custom_call.1} parent=1 // pred_region
      %104 = vsyncadd [#allocation4], 0
      %s105 = sshll.u32 [#allocation7], 4
      %s106 = int_to_ptr.vmem [resolvable:$true] %s105
      %s107 = sshll.u32 %s2, 4
      %s108 = int_to_ptr.hbm [resolvable:$true] %s107
      %113 = dma.vmem_to_hbm [thread:$0]  %s106, 256, %s108, [#allocation4], 32, 32, 2
    $region21: #{tpu_custom_call.1} parent=1 // pred_fallthru
      _
    // Predicated region
    $region22: #{tpu_custom_call.1} parent=1 // pred_check
      _
    $region23: #{tpu_custom_call.1} parent=1 // pred_check_branch
      %115 = sbr.rel (0) target = $region25
    $region24: #{tpu_custom_call.1} parent=1 // pred_region
      %117 = dma.done [#allocation4], 256
    $region25: #{tpu_custom_call.1} parent=1 // pred_fallthru
      _
    %118 = vsyncpa [#allocation3], 1
    %119 = vsyncpa [#allocation6], 1
    %120 = vsyncpa [#allocation4], 1

</llo_original>
